<compile_context>
chip_gen: v6e
topology: v6e:2x2x1
jax: 0.10.0
libtpu: 0.0.40
codegen_flags: <defaults>
</compile_context>

<pallas_src>
import functools

import jax
import jax.numpy as jnp
from jax import lax
from jax.experimental import pallas as pl
from jax.experimental.pallas import tpu as pltpu


def _round_up(x: int, m: int) -> int:
    return ((x + m - 1) // m) * m


# ----------------------------------------------------------------------------
# Tiled matmul (+ optional fused activation) kernel
# ----------------------------------------------------------------------------
def _matmul_kernel(a_ref, b_ref, o_ref, acc_ref, *, act, trans_b, n_k):
    k = pl.program_id(2)

    @pl.when(k == 0)
    def _init():
        acc_ref[...] = jnp.zeros_like(acc_ref)

    a = a_ref[...]
    b = b_ref[...]
    if trans_b:
        # a:(tm,tk) x b:(tn,tk) contracting the last dims -> (tm,tn) on the MXU
        acc_ref[...] += lax.dot_general(
            a, b,
            dimension_numbers=(((1,), (1,)), ((), ())),
            preferred_element_type=jnp.float32)
    else:
        acc_ref[...] += jnp.dot(a, b, preferred_element_type=jnp.float32)

    @pl.when(k == n_k - 1)
    def _finalize():
        r = acc_ref[...]
        if act == "tanh":
            r = jnp.tanh(r)
        elif act == "sigmoid":
            r = jax.nn.sigmoid(r)
        o_ref[...] = r.astype(o_ref.dtype)


def matmul_act(a, b, *, act=None, trans_b=False,
               tm_target=256, tn_target=256, tk_target=512):
    """Computes act(a @ b) (or act(a @ b.T) if trans_b) with a tiled Pallas kernel.

    Inputs are zero-padded to tile multiples (zeros contribute nothing to the
    contraction; padded output rows/cols are sliced away before returning).
    """
    M, K = a.shape
    if trans_b:
        N, Kb = b.shape
    else:
        Kb, N = b.shape
    assert K == Kb, (a.shape, b.shape, trans_b)

    # Tile sizes respecting the (8, 128) layout granularity.
    tm = min(tm_target, _round_up(M, 8))
    tn = min(tn_target, _round_up(N, 128))
    tk = min(tk_target, _round_up(K, 128))

    Mp, Np, Kp = _round_up(M, tm), _round_up(N, tn), _round_up(K, tk)

    a_p = jnp.pad(a, ((0, Mp - M), (0, Kp - K)))
    if trans_b:
        b_p = jnp.pad(b, ((0, Np - N), (0, Kp - K)))
        b_spec = pl.BlockSpec((tn, tk), lambda i, j, k: (j, k))
    else:
        b_p = jnp.pad(b, ((0, Kp - K), (0, Np - N)))
        b_spec = pl.BlockSpec((tk, tn), lambda i, j, k: (k, j))

    n_k = Kp // tk
    grid = (Mp // tm, Np // tn, n_k)

    cost = pl.CostEstimate(
        flops=2 * Mp * Np * Kp,
        transcendentals=(Mp * Np) if act is not None else 0,
        bytes_accessed=4 * (Mp * Kp + Kp * Np + Mp * Np),
    )

    out = pl.pallas_call(
        functools.partial(_matmul_kernel, act=act, trans_b=trans_b, n_k=n_k),
        out_shape=jax.ShapeDtypeStruct((Mp, Np), jnp.float32),
        grid_spec=pltpu.PrefetchScalarGridSpec(
            num_scalar_prefetch=0,
            grid=grid,
            in_specs=[pl.BlockSpec((tm, tk), lambda i, j, k: (i, k)), b_spec],
            out_specs=pl.BlockSpec((tm, tn), lambda i, j, k: (i, j)),
            scratch_shapes=[pltpu.VMEM((tm, tn), jnp.float32)],
        ),
        compiler_params=pltpu.CompilerParams(
            dimension_semantics=("parallel", "parallel", "arbitrary")),
        cost_estimate=cost,
    )(a_p, b_p)

    return out[:M, :N]


# ----------------------------------------------------------------------------
# IGAE encoder built from the kernel
# ----------------------------------------------------------------------------
def gnn_layer(features, adj, weight, *, active):
    # TODO(synk): torch.spmm uses a sparse adjacency; here adj is treated as a
    # dense matrix and streamed through the same tiled matmul kernel.
    support = matmul_act(features, weight, act=("tanh" if active else None))
    output = matmul_act(adj, support)
    az = matmul_act(adj, output)
    return output, az


def igae_encoder(x, adj, w1, w2, w3):
    z_1, az_1 = gnn_layer(x, adj, w1, active=True)
    z_2, az_2 = gnn_layer(z_1, adj, w2, active=True)
    z_igae, az_3 = gnn_layer(z_2, adj, w3, active=False)
    z_igae_adj = matmul_act(z_igae, z_igae, act="sigmoid", trans_b=True)
    return z_igae, z_igae_adj, [az_1, az_2, az_3], [z_1, z_2, z_igae]


# ----------------------------------------------------------------------------
# Pure-JAX reference (mirrors the PyTorch forward) for verification
# ----------------------------------------------------------------------------
def igae_encoder_ref(x, adj, w1, w2, w3):
    s1 = jnp.tanh(x @ w1); z1 = adj @ s1; az1 = adj @ z1
    s2 = jnp.tanh(z1 @ w2); z2 = adj @ s2; az2 = adj @ z2
    s3 = z2 @ w3; z3 = adj @ s3; az3 = adj @ z3
    zadj = jax.nn.sigmoid(z3 @ z3.T)
    return z3, zadj, [az1, az2, az3], [z1, z2, z3]


if __name__ == "__main__":
    key = jax.random.PRNGKey(0)
    n_nodes, n_input = 64, 48
    enc1, enc2, enc3 = 32, 32, 16
    k_x, k_a, k1, k2, k3 = jax.random.split(key, 5)

    x = jax.random.normal(k_x, (n_nodes, n_input), dtype=jnp.float32)

    # Deterministic symmetric, self-looped, row-normalized adjacency.
    a_raw = (jax.random.uniform(k_a, (n_nodes, n_nodes)) < 0.1).astype(jnp.float32)
    a_raw = jnp.clip(a_raw + a_raw.T + jnp.eye(n_nodes, dtype=jnp.float32), 0.0, 1.0)
    adj = a_raw / jnp.sum(a_raw, axis=1, keepdims=True)

    def xavier(k, shape):
        lim = (6.0 / (shape[0] + shape[1])) ** 0.5
        return jax.random.uniform(k, shape, jnp.float32, -lim, lim)

    w1 = xavier(k1, (n_input, enc1))
    w2 = xavier(k2, (enc1, enc2))
    w3 = xavier(k3, (enc2, enc3))

    out = jax.block_until_ready(igae_encoder(x, adj, w1, w2, w3))
    ref = igae_encoder_ref(x, adj, w1, w2, w3)

    z_igae, z_adj, az_list, z_list = out
    z_igae_r, z_adj_r, az_list_r, z_list_r = ref

    assert z_igae.shape == (n_nodes, enc3), z_igae.shape
    assert z_adj.shape == (n_nodes, n_nodes), z_adj.shape
    assert jnp.allclose(z_igae, z_igae_r, atol=1e-5, rtol=1e-5), "z_igae mismatch"
    assert jnp.allclose(z_adj, z_adj_r, atol=1e-5, rtol=1e-5), "z_igae_adj mismatch"
    for got, want in zip(az_list + z_list, az_list_r + z_list_r):
        assert jnp.allclose(got, want, atol=1e-5, rtol=1e-5), "az/z list mismatch"

    print("KERNEL_OK")
</pallas_src>

<mosaic_0001>
module attributes {stable_mosaic.version = 11 : i64} {
  func.func @_matmul_kernel(%arg0: i32, %arg1: i32, %arg2: i32, %arg3: memref<64x128xf32, #tpu.memory_space<vmem>>, %arg4: memref<128x128xf32, #tpu.memory_space<vmem>>, %arg5: memref<64x128xf32, #tpu.memory_space<vmem>>, %arg6: memref<64x128xf32, #tpu.memory_space<vmem>>) attributes {dimension_semantics = [#tpu.dimension_semantics<parallel>, #tpu.dimension_semantics<parallel>, #tpu.dimension_semantics<arbitrary>], iteration_bounds = array<i64: 1, 1, 1>, scalar_prefetch = 0 : i64, scratch_operands = 1 : i64, tpu.core_type = #tpu.core_type<tc>, window_params = [{transform_indices = @transform_0, window_bounds = array<i64: 64, 128>}, {transform_indices = @transform_1, window_bounds = array<i64: 128, 128>}, {transform_indices = @transform_2, window_bounds = array<i64: 64, 128>}]} {
    %c0_i32 = arith.constant 0 : i32
    %0 = arith.cmpi eq, %arg2, %c0_i32 : i32
    %1 = arith.extui %0 : i1 to i32
    %c0_i32_0 = arith.constant 0 : i32
    %2 = arith.cmpi ne, %1, %c0_i32_0 : i32
    scf.if %2 {
      %cst_10 = arith.constant 0.000000e+00 : f32
      %12 = vector.broadcast %cst_10 : f32 to vector<64x128xf32>
      %c0_11 = arith.constant 0 : index
      %c0_12 = arith.constant 0 : index
      %13 = vector.load %arg6[%c0_11, %c0_12] : memref<64x128xf32, #tpu.memory_space<vmem>>, vector<64x128xf32>
      tpu.vector_store %arg6[%c0_11, %c0_12], %12 {strides = array<i32>} : memref<64x128xf32, #tpu.memory_space<vmem>>, vector<64x128xf32>,
    } else {
    }
    %c0 = arith.constant 0 : index
    %c0_1 = arith.constant 0 : index
    %3 = vector.load %arg3[%c0, %c0_1] : memref<64x128xf32, #tpu.memory_space<vmem>>, vector<64x128xf32>
    %c0_2 = arith.constant 0 : index
    %c0_3 = arith.constant 0 : index
    %4 = vector.load %arg4[%c0_2, %c0_3] : memref<128x128xf32, #tpu.memory_space<vmem>>, vector<128x128xf32>
    %c0_4 = arith.constant 0 : index
    %c0_5 = arith.constant 0 : index
    %5 = vector.load %arg6[%c0_4, %c0_5] : memref<64x128xf32, #tpu.memory_space<vmem>>, vector<64x128xf32>
    %cst = arith.constant dense<0.000000e+00> : vector<64x128xf32>
    %6 = tpu.matmul %3, %4, %cst {dimension_numbers = #tpu.dot_dimension_numbers<[1], [0], [0], [1], [0, 0, 1, 1], [], []>} : vector<64x128xf32>, vector<128x128xf32>, vector<64x128xf32> -> vector<64x128xf32>
    %7 = arith.addf %5, %6 : vector<64x128xf32>
    %c0_6 = arith.constant 0 : index
    %c0_7 = arith.constant 0 : index
    %8 = vector.load %arg6[%c0_6, %c0_7] : memref<64x128xf32, #tpu.memory_space<vmem>>, vector<64x128xf32>
    tpu.vector_store %arg6[%c0_6, %c0_7], %7 {strides = array<i32>} : memref<64x128xf32, #tpu.memory_space<vmem>>, vector<64x128xf32>,
    %c0_i32_8 = arith.constant 0 : i32
    %9 = arith.cmpi eq, %arg2, %c0_i32_8 : i32
    %10 = arith.extui %9 : i1 to i32
    %c0_i32_9 = arith.constant 0 : i32
    %11 = arith.cmpi ne, %10, %c0_i32_9 : i32
    scf.if %11 {
      %c0_10 = arith.constant 0 : index
      %c0_11 = arith.constant 0 : index
      %12 = vector.load %arg6[%c0_10, %c0_11] : memref<64x128xf32, #tpu.memory_space<vmem>>, vector<64x128xf32>
      %13 = math.tanh %12 : vector<64x128xf32>
      %c0_12 = arith.constant 0 : index
      %c0_13 = arith.constant 0 : index
      %14 = vector.load %arg5[%c0_12, %c0_13] : memref<64x128xf32, #tpu.memory_space<vmem>>, vector<64x128xf32>
      tpu.vector_store %arg5[%c0_12, %c0_13], %13 {strides = array<i32>} : memref<64x128xf32, #tpu.memory_space<vmem>>, vector<64x128xf32>,
    } else {
    }
    return
  }
  func.func @transform_0(%arg0: i32, %arg1: i32, %arg2: i32) -> (i32, i32) {
    %c0_i32 = arith.constant 0 : i32
    return %arg0, %arg2 : i32, i32
  }
  func.func @transform_1(%arg0: i32, %arg1: i32, %arg2: i32) -> (i32, i32) {
    %c0_i32 = arith.constant 0 : i32
    return %arg2, %arg1 : i32, i32
  }
  func.func @transform_2(%arg0: i32, %arg1: i32, %arg2: i32) -> (i32, i32) {
    %c0_i32 = arith.constant 0 : i32
    return %arg0, %arg1 : i32, i32
  }
}

</mosaic_0001>

<llo_original>
// kernel: tpu_custom_call.1
$region0: #{tpu_custom_call.1}
  #allocation0 [shape = 'u32[]', space=smem, size = 0x4, offset = 0x4, fixed_abs, tag = 'smem constant byte address 0x4 - core index']
  #allocation1 [shape = 'u32[144,128]{1,0:T(1,128)}', space=vmem, size = 0x12000, scoped, tag = 'internal scratch']
  #allocation2 [shape = 'f32[64,128]{1,0:T(8,128)}', space=vmem, size = 0x8000, scoped, tag = 'scratch operand']
  %s0 = inlined_call_operand.hbm [shape: f32[64,128], index: 0, kind: input, shape index: {}]
  %s1 = inlined_call_operand.hbm [shape: f32[128,128], index: 1, kind: input, shape index: {}]
  %s2 = inlined_call_operand.hbm [shape: f32[64,128], index: 2, kind: output, shape index: {}]
  %s3 = sld [smem:[#allocation0]]
  $region34: #{tpu_custom_call.1} parent=0
    _
  %s5 = ssub.s32 1, %s3
  %s6 = scalar_select 0, %s5, %s3
  $region1: #{tpu_custom_call.1} parent=0
    #allocation3 [shape = 'u8[32768]{0}', space=vmem, size = 0x8000, scoped, tag = 'input window, operand 0, single buffered']
    #allocation4 [shape = 's32[1]{0}', space=sflag, size = 0x4, scoped, tag = 'scoped memory for tpu_custom_call.1']
    #allocation5 [shape = 's32[1]{0}', space=sflag, size = 0x4, scoped, tag = 'scoped memory for tpu_custom_call.1']
    #allocation6 [shape = 'u8[65536]{0}', space=vmem, size = 0x10000, scoped, tag = 'input window, operand 1, single buffered']
    #allocation7 [shape = 's32[1]{0}', space=sflag, size = 0x4, scoped, tag = 'scoped memory for tpu_custom_call.1']
    #allocation8 [shape = 'u8[32768]{0}', space=vmem, size = 0x8000, scoped, tag = 'output window, operand 0, single buffered']
    %7 = vsyncpa [#allocation4], 0
    %8 = vsyncpa [#allocation7], 0
    %9 = vsyncpa [#allocation5], 0
    // Predicated region
    $region2: #{tpu_custom_call.1} parent=1 // pred_check
      _
    $region3: #{tpu_custom_call.1} parent=1 // pred_check_branch
      %11 = sbr.rel (0) target = $region5
    $region4: #{tpu_custom_call.1} parent=1 // pred_region
      %s13 = ssub.s32 1024, 1024
      %14 = vsyncadd [#allocation4], %s13
      %s15 = sshll.u32 [#allocation3], 4
      %s16 = int_to_ptr.vmem [resolvable:$true] %s15
      %21 = dma.hbm_to_vmem [thread:$0]  %s0, 1024, %s16, [#allocation4], 128, 128, 8
    $region5: #{tpu_custom_call.1} parent=1 // pred_fallthru
      _
    // Predicated region
    $region6: #{tpu_custom_call.1} parent=1 // pred_check
      _
    $region7: #{tpu_custom_call.1} parent=1 // pred_check_branch
      %23 = sbr.rel (0) target = $region9
    $region8: #{tpu_custom_call.1} parent=1 // pred_region
      %s25 = ssub.s32 2048, 2048
      %26 = vsyncadd [#allocation7], %s25
      %s27 = sshll.u32 [#allocation6], 4
      %s28 = int_to_ptr.vmem [resolvable:$true] %s27
      %33 = dma.hbm_to_vmem [thread:$0]  %s1, 2048, %s28, [#allocation7], 128, 128, 8
    $region9: #{tpu_custom_call.1} parent=1 // pred_fallthru
      _
    // Predicated region
    $region10: #{tpu_custom_call.1} parent=1 // pred_check
      _
    $region11: #{tpu_custom_call.1} parent=1 // pred_check_branch
      %35 = sbr.rel (0) target = $region13
    $region12: #{tpu_custom_call.1} parent=1 // pred_region
      %36 = dma.done [#allocation4], 1024
    $region13: #{tpu_custom_call.1} parent=1 // pred_fallthru
      _
    // Predicated region
    $region14: #{tpu_custom_call.1} parent=1 // pred_check
      _
    $region15: #{tpu_custom_call.1} parent=1 // pred_check_branch
      %38 = sbr.rel (0) target = $region17
    $region16: #{tpu_custom_call.1} parent=1 // pred_region
      %39 = dma.done [#allocation7], 2048
    $region17: #{tpu_custom_call.1} parent=1 // pred_fallthru
      _
    %p40 = scmp.eq.s32.totalorder 0, 0
    // Predicated region
    $region18: #{tpu_custom_call.1} parent=1 // pred_check
      %p41 = pneg %p40
    $region19: #{tpu_custom_call.1} parent=1 // pred_check_branch
      %43 = sbr.rel (%p41) target = $region21
    $region20: #{tpu_custom_call.1} parent=1 // pred_region
      %44 = vst [vmem:[#allocation2] sm:$0xff] 0.0
      %45 = vst [vmem:[#allocation2 + $0x8] sm:$0xff] 0.0
      %46 = vst [vmem:[#allocation2 + $0x10] sm:$0xff] 0.0
      %47 = vst [vmem:[#allocation2 + $0x18] sm:$0xff] 0.0
      %48 = vst [vmem:[#allocation2 + $0x20] sm:$0xff] 0.0
      %49 = vst [vmem:[#allocation2 + $0x28] sm:$0xff] 0.0
      %50 = vst [vmem:[#allocation2 + $0x30] sm:$0xff] 0.0
      %51 = vst [vmem:[#allocation2 + $0x38] sm:$0xff] 0.0
    $region21: #{tpu_custom_call.1} parent=1 // pred_fallthru
      _
    %v52 = vld [vmem:[#allocation3] sm:$0xff]
    %v53 = vld [vmem:[#allocation3 + $0x8] sm:$0xff]
    %v54 = vld [vmem:[#allocation3 + $0x10] sm:$0xff]
    %v55 = vld [vmem:[#allocation3 + $0x18] sm:$0xff]
    %v56 = vld [vmem:[#allocation3 + $0x20] sm:$0xff]
    %v57 = vld [vmem:[#allocation3 + $0x28] sm:$0xff]
    %v58 = vld [vmem:[#allocation3 + $0x30] sm:$0xff]
    %v59 = vld [vmem:[#allocation3 + $0x38] sm:$0xff]
    %v60 = vld [vmem:[#allocation6] sm:$0xff]
    %v61 = vld [vmem:[#allocation6 + $0x8] sm:$0xff]
    %v62 = vld [vmem:[#allocation6 + $0x10] sm:$0xff]
    %v63 = vld [vmem:[#allocation6 + $0x18] sm:$0xff]
    %v64 = vld [vmem:[#allocation6 + $0x20] sm:$0xff]
    %v65 = vld [vmem:[#allocation6 + $0x28] sm:$0xff]
    %v66 = vld [vmem:[#allocation6 + $0x30] sm:$0xff]
    %v67 = vld [vmem:[#allocation6 + $0x38] sm:$0xff]
    %v68 = vld [vmem:[#allocation6 + $0x40] sm:$0xff]
    %v69 = vld [vmem:[#allocation6 + $0x48] sm:$0xff]
    %v70 = vld [vmem:[#allocation6 + $0x50] sm:$0xff]
    %v71 = vld [vmem:[#allocation6 + $0x58] sm:$0xff]
    %v72 = vld [vmem:[#allocation6 + $0x60] sm:$0xff]
    %v73 = vld [vmem:[#allocation6 + $0x68] sm:$0xff]
    %v74 = vld [vmem:[#allocation6 + $0x70] sm:$0xff]
    %v75 = vld [vmem:[#allocation6 + $0x78] sm:$0xff]
    %v76 = vld [vmem:[#allocation2] sm:$0xff]
    %v77 = vld [vmem:[#allocation2 + $0x8] sm:$0xff]
    %v78 = vld [vmem:[#allocation2 + $0x10] sm:$0xff]
    %v79 = vld [vmem:[#allocation2 + $0x18] sm:$0xff]
    %v80 = vld [vmem:[#allocation2 + $0x20] sm:$0xff]
    %v81 = vld [vmem:[#allocation2 + $0x28] sm:$0xff]
    %v82 = vld [vmem:[#allocation2 + $0x30] sm:$0xff]
    %v83 = vld [vmem:[#allocation2 + $0x38] sm:$0xff]
    %84 = vmatprep.subr.mxu0 0.0
    %85 = vmatpush1.msra.mxu0 %v75
    %86 = vmatprep.subr.mxu0 0.0
    %87 = vmatpush1.msra.mxu0 %v74
    %88 = vmatprep.subr.mxu0 0.0
    %89 = vmatpush1.msra.mxu0 %v73
    %90 = vmatprep.subr.mxu0 0.0
    %91 = vmatpush1.msra.mxu0 %v72
    %92 = vmatprep.subr.mxu0 0.0
    %93 = vmatpush1.msra.mxu0 %v71
    %94 = vmatprep.subr.mxu0 0.0
    %95 = vmatpush1.msra.mxu0 %v70
    %96 = vmatprep.subr.mxu0 0.0
    %97 = vmatpush1.msra.mxu0 %v69
    %98 = vmatprep.subr.mxu0 0.0
    %99 = vmatpush1.msra.mxu0 %v68
    %100 = vmatprep.subr.mxu0 0.0
    %101 = vmatpush1.msra.mxu0 %v67
    %102 = vmatprep.subr.mxu0 0.0
    %103 = vmatpush1.msra.mxu0 %v66
    %104 = vmatprep.subr.mxu0 0.0
    %105 = vmatpush1.msra.mxu0 %v65
    %106 = vmatprep.subr.mxu0 0.0
    %107 = vmatpush1.msra.mxu0 %v64
    %108 = vmatprep.subr.mxu0 0.0
    %109 = vmatpush1.msra.mxu0 %v63
    %110 = vmatprep.subr.mxu0 0.0
    %111 = vmatpush1.msra.mxu0 %v62
    %112 = vmatprep.subr.mxu0 0.0
    %113 = vmatpush1.msra.mxu0 %v61
    %114 = vmatprep.subr.mxu0 0.0
    %115 = vmatpush1.msra.mxu0 %v60
    %116 = vmatprep.subr.mxu0 0.0
    %117 = vmatpush2.msra.mxu0 0.0
    %118 = vmatprep.subr.mxu0 0.0
    %119 = vmatpush2.msra.mxu0 0.0
    %120 = vmatprep.subr.mxu0 0.0
    %121 = vmatpush2.msra.mxu0 0.0
    %122 = vmatprep.subr.mxu0 0.0
    %123 = vmatpush2.msra.mxu0 0.0
    %124 = vmatprep.subr.mxu0 0.0
    %125 = vmatpush2.msra.mxu0 0.0
    %126 = vmatprep.subr.mxu0 0.0
    %127 = vmatpush2.msra.mxu0 0.0
    %128 = vmatprep.subr.mxu0 0.0
    %129 = vmatpush2.msra.mxu0 0.0
    %130 = vmatprep.subr.mxu0 0.0
    %131 = vmatpush2.msra.mxu0 0.0
    %132 = vmatprep.subr.mxu0 0.0
    %133 = vmatpush2.msra.mxu0 0.0
    %134 = vmatprep.subr.mxu0 0.0
    %135 = vmatpush2.msra.mxu0 0.0
    %136 = vmatprep.subr.mxu0 0.0
    %137 = vmatpush2.msra.mxu0 0.0
    %138 = vmatprep.subr.mxu0 0.0
    %139 = vmatpush2.msra.mxu0 0.0
    %140 = vmatprep.subr.mxu0 0.0
    %141 = vmatpush2.msra.mxu0 0.0
    %142 = vmatprep.subr.mxu0 0.0
    %143 = vmatpush2.msra.mxu0 0.0
    %144 = vmatprep.subr.mxu0 0.0
    %145 = vmatpush2.msra.mxu0 0.0
    %146 = vmatprep.subr.mxu0 0.0
    %147 = vmatpush2.msra.mxu0 0.0
    %148 = vmatprep.mubr.f32.mxu0 0.0
    %149 = vmatmul.mubr.f32.gmra.mxu0 %v52
    %v150 = vpop.f32.mrf.mxu0
    %v151 = vadd.f32 0.0, %v150
    %v152 = vpop.f32.mrf.mxu0
    %153 = vmatprep.mubr.f32.mxu0 0.0
    %154 = vmatmul.mubr.f32.gmra.mxu0 %v53
    %v155 = vpop.f32.mrf.mxu0
    %v156 = vadd.f32 0.0, %v155
    %v157 = vpop.f32.mrf.mxu0
    %158 = vmatprep.mubr.f32.mxu0 0.0
    %159 = vmatmul.mubr.f32.gmra.mxu0 %v54
    %v160 = vpop.f32.mrf.mxu0
    %v161 = vadd.f32 0.0, %v160
    %v162 = vpop.f32.mrf.mxu0
    %163 = vmatprep.mubr.f32.mxu0 0.0
    %164 = vmatmul.mubr.f32.gmra.mxu0 %v55
    %v165 = vpop.f32.mrf.mxu0
    %v166 = vadd.f32 0.0, %v165
    %v167 = vpop.f32.mrf.mxu0
    %168 = vmatprep.mubr.f32.mxu0 0.0
    %169 = vmatmul.mubr.f32.gmra.mxu0 %v56
    %v170 = vpop.f32.mrf.mxu0
    %v171 = vadd.f32 0.0, %v170
    %v172 = vpop.f32.mrf.mxu0
    %173 = vmatprep.mubr.f32.mxu0 0.0
    %174 = vmatmul.mubr.f32.gmra.mxu0 %v57
    %v175 = vpop.f32.mrf.mxu0
    %v176 = vadd.f32 0.0, %v175
    %v177 = vpop.f32.mrf.mxu0
    %178 = vmatprep.mubr.f32.mxu0 0.0
    %179 = vmatmul.mubr.f32.gmra.mxu0 %v58
    %v180 = vpop.f32.mrf.mxu0
    %v181 = vadd.f32 0.0, %v180
    %v182 = vpop.f32.mrf.mxu0
    %183 = vmatprep.mubr.f32.mxu0 0.0
    %184 = vmatmul.mubr.f32.gmra.mxu0 %v59
    %v185 = vpop.f32.mrf.mxu0
    %v186 = vadd.f32 0.0, %v185
    %v187 = vpop.f32.mrf.mxu0
    %188 = vdwg.mxu0
    %v189 = vadd.f32 %v76, %v151
    %v190 = vadd.f32 %v77, %v156
    %v191 = vadd.f32 %v78, %v161
    %v192 = vadd.f32 %v79, %v166
    %v193 = vadd.f32 %v80, %v171
    %v194 = vadd.f32 %v81, %v176
    %v195 = vadd.f32 %v82, %v181
    %v196 = vadd.f32 %v83, %v186
    %197 = vst [vmem:[#allocation2] sm:$0xff] %v189
    %198 = vst [vmem:[#allocation2 + $0x8] sm:$0xff] %v190
    %199 = vst [vmem:[#allocation2 + $0x10] sm:$0xff] %v191
    %200 = vst [vmem:[#allocation2 + $0x18] sm:$0xff] %v192
    %201 = vst [vmem:[#allocation2 + $0x20] sm:$0xff] %v193
    %202 = vst [vmem:[#allocation2 + $0x28] sm:$0xff] %v194
    %203 = vst [vmem:[#allocation2 + $0x30] sm:$0xff] %v195
    %204 = vst [vmem:[#allocation2 + $0x38] sm:$0xff] %v196
    // Predicated region
    $region22: #{tpu_custom_call.1} parent=1 // pred_check
      %p205 = pneg %p40
    $region23: #{tpu_custom_call.1} parent=1 // pred_check_branch
      %207 = sbr.rel (%p205) target = $region25
    $region24: #{tpu_custom_call.1} parent=1 // pred_region
      %v208 = vld [vmem:[#allocation2] sm:$0xff]
      %v209 = vld [vmem:[#allocation2 + $0x8] sm:$0xff]
      %v210 = vld [vmem:[#allocation2 + $0x10] sm:$0xff]
      %v211 = vld [vmem:[#allocation2 + $0x18] sm:$0xff]
      %v212 = vld [vmem:[#allocation2 + $0x20] sm:$0xff]
      %v213 = vld [vmem:[#allocation2 + $0x28] sm:$0xff]
      %v214 = vld [vmem:[#allocation2 + $0x30] sm:$0xff]
      %v215 = vld [vmem:[#allocation2 + $0x38] sm:$0xff]
      %v216 = vtanh.pop %v208
      %v217 = vtanh.pop %v209
      %v218 = vtanh.pop %v210
      %v219 = vtanh.pop %v211
      %v220 = vtanh.pop %v212
      %v221 = vtanh.pop %v213
      %v222 = vtanh.pop %v214
      %v223 = vtanh.pop %v215
      %224 = vst [vmem:[#allocation8] sm:$0xff] %v216
      %225 = vst [vmem:[#allocation8 + $0x8] sm:$0xff] %v217
      %226 = vst [vmem:[#allocation8 + $0x10] sm:$0xff] %v218
      %227 = vst [vmem:[#allocation8 + $0x18] sm:$0xff] %v219
      %228 = vst [vmem:[#allocation8 + $0x20] sm:$0xff] %v220
      %229 = vst [vmem:[#allocation8 + $0x28] sm:$0xff] %v221
      %230 = vst [vmem:[#allocation8 + $0x30] sm:$0xff] %v222
      %231 = vst [vmem:[#allocation8 + $0x38] sm:$0xff] %v223
    $region25: #{tpu_custom_call.1} parent=1 // pred_fallthru
      _
    // Predicated region
    $region26: #{tpu_custom_call.1} parent=1 // pred_check
      _
    $region27: #{tpu_custom_call.1} parent=1 // pred_check_branch
      %233 = sbr.rel (0) target = $region29
    $region28: #{tpu_custom_call.1} parent=1 // pred_region
      %s235 = ssub.s32 1024, 1024
      %236 = vsyncadd [#allocation5], %s235
      %s237 = sshll.u32 [#allocation8], 4
      %s238 = int_to_ptr.vmem [resolvable:$true] %s237
      %243 = dma.vmem_to_hbm [thread:$0]  %s238, 1024, %s2, [#allocation5], 128, 128, 8
    $region29: #{tpu_custom_call.1} parent=1 // pred_fallthru
      _
    // Predicated region
    $region30: #{tpu_custom_call.1} parent=1 // pred_check
      _
    $region31: #{tpu_custom_call.1} parent=1 // pred_check_branch
      %245 = sbr.rel (0) target = $region33
    $region32: #{tpu_custom_call.1} parent=1 // pred_region
      %246 = dma.done [#allocation5], 1024
    $region33: #{tpu_custom_call.1} parent=1 // pred_fallthru
      _
    %247 = vsyncpa [#allocation4], 1
    %248 = vsyncpa [#allocation7], 1
    %249 = vsyncpa [#allocation5], 1

</llo_original>
